<compile_context>
chip_gen: v5e
topology: v5e:2x2
jax: 0.10.0
libtpu: 0.0.40
codegen_flags: <defaults>
</compile_context>

<pallas_src>
import functools
import math

import jax
import jax.numpy as jnp
import numpy as np
from jax.experimental import pallas as pl
from jax.experimental.pallas import tpu as pltpu

_INV_SQRT2 = 0.7071067811865476


def _round_up(x, m):
    return ((x + m - 1) // m) * m


def _erf_poly(x):
    # Abramowitz & Stegun 7.1.26 rational approximation of erf, |err| < 1.5e-7.
    p = 0.3275911
    a1, a2, a3, a4, a5 = (0.254829592, -0.284496736, 1.421413741,
                          -1.453152027, 1.061405429)
    sign = jnp.where(x >= 0.0, 1.0, -1.0)
    ax = jnp.abs(x)
    # Approximate reciprocal lowers to the (otherwise mostly idle) EUP slot.
    t = pl.reciprocal(1.0 + p * ax, approx=True)
    poly = t * (a1 + t * (a2 + t * (a3 + t * (a4 + t * a5))))
    return sign * (1.0 - poly * jnp.exp(-ax * ax))


def _gelu_exact(x):
    # Exact GELU: 0.5 * x * (1 + erf(x / sqrt(2))), matching F.gelu default.
    return 0.5 * x * (1.0 + _erf_poly(x * _INV_SQRT2))


def _ffn_kernel(use_act, x_ref, w0_ref, b0_ref, w1_ref, b1_ref, out_ref, acc_ref):
    k = pl.program_id(1)

    @pl.when(k == 0)
    def _():
        acc_ref[...] = jnp.zeros_like(acc_ref)

    # (bm, dims) @ (dims, tk) on the MXU in bf16, f32 accumulation.
    h = jnp.dot(x_ref[...], w0_ref[...], preferred_element_type=jnp.float32)
    h = h + b0_ref[...].astype(jnp.float32)
    if use_act:
        h = _gelu_exact(h)
    # Dropout p=0.0 / eval mode => identity.
    # TODO(synk): training-mode dropout (p>0) would need pltpu.prng_* masks here.
    acc_ref[...] += jnp.dot(h.astype(w1_ref.dtype), w1_ref[...],
                            preferred_element_type=jnp.float32)

    @pl.when(k == pl.num_programs(1) - 1)
    def _():
        out_ref[...] = (acc_ref[...]
                        + b1_ref[...].astype(jnp.float32)).astype(out_ref.dtype)


def _vmem_limit_bytes():
    try:
        kind = jax.devices()[0].device_kind.lower()
    except Exception:
        kind = ""
    if "v7" in kind:
        return 56 * 1024 * 1024      # v7x: 64 MiB physical -> leave headroom
    if "v5" in kind or "v6" in kind:
        return 100 * 1024 * 1024     # v5e/v6e: 128 MiB physical VMEM
    return None                      # unknown chip: keep the compiler default


def feed_forward(params, x, *, use_act=True, block_m=256, block_k=512):
    """Forward of FeedForward(dims, expansion_factor, dropout=0, use_act), eval mode."""
    if x.shape[-1] == 0:
        # Mirrors the PyTorch module's early-exit for an empty feature dim.
        return x
    out_dtype = x.dtype
    dims = x.shape[-1]
    hidden = params["w0"].shape[1]
    out_dims = params["w1"].shape[1]
    lead = x.shape[:-1]

    # Flatten all leading dims into one row axis; feed the MXU bf16.
    xf = x.reshape(-1, dims).astype(jnp.bfloat16)
    m = xf.shape[0]

    # Row block: large (amortizes per-step overhead), multiple of 8, and split
    # so the "parallel" axis has >= 2 blocks (both v7x TensorCores get work).
    bm = min(block_m, _round_up(m, 8))
    if m > 8 and pl.cdiv(m, bm) < 2:
        bm = max(8, _round_up(pl.cdiv(m, 2), 8))
    n_m = pl.cdiv(m, bm)

    # Hidden tile: multiple of 128 (default block_k=512 is 256-aligned for the
    # v6e/v7x MXU); hidden is zero-padded to a whole number of tiles.
    tk = min(block_k, _round_up(hidden, 128))
    hidden_p = _round_up(hidden, tk)
    n_k = hidden_p // tk

    # Lane-dense output: pad out_dims up to a multiple of 128, slice back after.
    out_p = _round_up(out_dims, 128)

    w0 = params["w0"].astype(jnp.bfloat16)
    b0 = params["b0"].astype(jnp.float32).reshape(1, hidden)
    w1 = params["w1"].astype(jnp.bfloat16)
    b1 = params["b1"].astype(jnp.float32).reshape(1, out_dims)
    if hidden_p != hidden:
        # Zero-padded hidden columns: gelu(x @ 0 + 0) == 0 and the matching w1
        # rows are 0, so they contribute nothing to the accumulator.
        w0 = jnp.pad(w0, ((0, 0), (0, hidden_p - hidden)))
        b0 = jnp.pad(b0, ((0, 0), (0, hidden_p - hidden)))
        w1 = jnp.pad(w1, ((0, hidden_p - hidden), (0, 0)))
    if out_p != out_dims:
        w1 = jnp.pad(w1, ((0, 0), (0, out_p - out_dims)))
        b1 = jnp.pad(b1, ((0, 0), (0, out_p - out_dims)))

    cost = pl.CostEstimate(
        flops=2 * m * (dims * hidden + hidden * out_dims),
        transcendentals=(m * hidden) if use_act else 0,
        bytes_accessed=int(m * dims * 2 + dims * hidden_p * 2
                           + hidden_p * out_p * 2 + (hidden_p + out_p) * 4
                           + m * out_p * np.dtype(out_dtype).itemsize),
    )

    cp_kwargs = dict(dimension_semantics=("parallel", "arbitrary"))
    vmem_limit = _vmem_limit_bytes()
    if vmem_limit is not None:
        cp_kwargs["vmem_limit_bytes"] = vmem_limit

    row_block = lambda i, k: (i, 0)

    out = pl.pallas_call(
        functools.partial(_ffn_kernel, use_act),
        out_shape=jax.ShapeDtypeStruct((m, out_p), out_dtype),
        grid=(n_m, n_k),
        in_specs=[
            pl.BlockSpec((bm, dims), row_block),             # x rows (reused over k)
            pl.BlockSpec((dims, tk), lambda i, k: (0, k)),   # w0 hidden tile
            pl.BlockSpec((1, tk), lambda i, k: (0, k)),      # b0 hidden tile
            pl.BlockSpec((tk, out_p), lambda i, k: (k, 0)),  # w1 hidden tile
            pl.BlockSpec((1, out_p), lambda i, k: (0, 0)),   # b1 (constant)
        ],
        out_specs=pl.BlockSpec((bm, out_p), row_block),
        scratch_shapes=[pltpu.VMEM((bm, out_p), jnp.float32)],
        compiler_params=pltpu.CompilerParams(**cp_kwargs),
        cost_estimate=cost,
    )(xf, w0, b0, w1, b1)

    if out_p != out_dims:
        out = out[:, :out_dims]
    return out.reshape(*lead, out_dims)


def reference(params, x, use_act=True):
    """Pure-JAX f32 mirror of the PyTorch forward (eval mode, dropout p=0)."""
    if x.shape[-1] == 0:
        return x
    h = x.astype(jnp.float32) @ params["w0"] + params["b0"]
    if use_act:
        h = jax.nn.gelu(h, approximate=False)   # exact erf GELU (F.gelu default)
    return h @ params["w1"] + params["b1"]


def init_params(key, dims, hidden, out_dims):
    """nn.Linear default init (kaiming_uniform a=sqrt(5) => U(+-1/sqrt(fan_in)))."""
    ks = jax.random.split(key, 4)

    def u(k, shape, fan_in):
        b = 1.0 / math.sqrt(fan_in)
        return jax.random.uniform(k, shape, jnp.float32, -b, b)

    return {
        "w0": u(ks[0], (dims, hidden), dims),       # stored transposed: (in, out)
        "b0": u(ks[1], (1, hidden), dims),
        "w1": u(ks[2], (hidden, out_dims), hidden),
        "b1": u(ks[3], (1, out_dims), hidden),
    }


if __name__ == "__main__":
    # Small shapes consistent with the module: x of shape (batch, seq, dims),
    # expansion_factor=4.0 -> hidden = 4*dims, out_dims=0 -> out_dims = dims.
    batch, seq, dims = 4, 8, 32
    expansion_factor = 4.0
    hidden = int(expansion_factor * dims)
    out_dims = dims

    key = jax.random.PRNGKey(0)
    kx, kp = jax.random.split(key)
    x = jax.random.normal(kx, (batch, seq, dims), jnp.float32)
    params = init_params(kp, dims, hidden, out_dims)

    out = feed_forward(params, x, use_act=True)
    out = jax.block_until_ready(out)

    # bf16 MXU inputs with f32 accumulation vs. the pure-f32 reference.
    ref = reference(params, x, use_act=True)
    np.testing.assert_allclose(np.asarray(out), np.asarray(ref),
                               atol=2e-2, rtol=2e-2)
    print("KERNEL_OK")
</pallas_src>

<mosaic_0001>
module attributes {stable_mosaic.version = 11 : i64} {
  func.func @_ffn_kernel(%arg0: i32, %arg1: i32, %arg2: memref<16x32xbf16, #tpu.memory_space<vmem>>, %arg3: memref<32x128xbf16, #tpu.memory_space<vmem>>, %arg4: memref<1x128xf32, #tpu.memory_space<vmem>>, %arg5: memref<128x128xbf16, #tpu.memory_space<vmem>>, %arg6: memref<1x128xf32, #tpu.memory_space<vmem>>, %arg7: memref<16x128xf32, #tpu.memory_space<vmem>>, %arg8: memref<16x128xf32, #tpu.memory_space<vmem>>) attributes {dimension_semantics = [#tpu.dimension_semantics<parallel>, #tpu.dimension_semantics<arbitrary>], iteration_bounds = array<i64: 2, 1>, scalar_prefetch = 0 : i64, scratch_operands = 1 : i64, tpu.core_type = #tpu.core_type<tc>, window_params = [{transform_indices = @transform_0, window_bounds = array<i64: 16, 32>}, {transform_indices = @transform_1, window_bounds = array<i64: 32, 128>}, {transform_indices = @transform_2, window_bounds = array<i64: 1, 128>}, {transform_indices = @transform_3, window_bounds = array<i64: 128, 128>}, {pipeline_mode = #tpu.pipeline_mode<synchronous>, transform_indices = @transform_4, window_bounds = array<i64: 1, 128>}, {transform_indices = @transform_5, window_bounds = array<i64: 16, 128>}]} {
    %c0_i32 = arith.constant 0 : i32
    %0 = arith.cmpi eq, %arg1, %c0_i32 : i32
    %1 = arith.extui %0 : i1 to i32
    %c0_i32_0 = arith.constant 0 : i32
    %2 = arith.cmpi ne, %1, %c0_i32_0 : i32
    scf.if %2 {
      %cst_30 = arith.constant 0.000000e+00 : f32
      %58 = vector.broadcast %cst_30 : f32 to vector<16x128xf32>
      %c0_31 = arith.constant 0 : index
      %c0_32 = arith.constant 0 : index
      %59 = vector.load %arg8[%c0_31, %c0_32] : memref<16x128xf32, #tpu.memory_space<vmem>>, vector<16x128xf32>
      tpu.vector_store %arg8[%c0_31, %c0_32], %58 {strides = array<i32>} : memref<16x128xf32, #tpu.memory_space<vmem>>, vector<16x128xf32>,
    } else {
    }
    %c0 = arith.constant 0 : index
    %c0_1 = arith.constant 0 : index
    %3 = vector.load %arg2[%c0, %c0_1] : memref<16x32xbf16, #tpu.memory_space<vmem>>, vector<16x32xbf16>
    %c0_2 = arith.constant 0 : index
    %c0_3 = arith.constant 0 : index
    %4 = vector.load %arg3[%c0_2, %c0_3] : memref<32x128xbf16, #tpu.memory_space<vmem>>, vector<32x128xbf16>
    %cst = arith.constant dense<0.000000e+00> : vector<16x128xf32>
    %5 = tpu.matmul %3, %4, %cst {dimension_numbers = #tpu.dot_dimension_numbers<[1], [0], [0], [1], [0, 0, 1, 1], [], []>} : vector<16x32xbf16>, vector<32x128xbf16>, vector<16x128xf32> -> vector<16x128xf32>
    %c0_4 = arith.constant 0 : index
    %c0_5 = arith.constant 0 : index
    %6 = vector.load %arg4[%c0_4, %c0_5] : memref<1x128xf32, #tpu.memory_space<vmem>>, vector<1x128xf32>
    %7 = vector.broadcast %6 : vector<1x128xf32> to vector<16x128xf32>
    %8 = arith.addf %5, %7 : vector<16x128xf32>
    %cst_6 = arith.constant 5.000000e-01 : f32
    %9 = vector.broadcast %cst_6 : f32 to vector<16x128xf32>
    %10 = arith.mulf %9, %8 : vector<16x128xf32>
    %cst_7 = arith.constant 0.707106769 : f32
    %11 = vector.broadcast %cst_7 : f32 to vector<16x128xf32>
    %12 = arith.mulf %8, %11 : vector<16x128xf32>
    %cst_8 = arith.constant 0.000000e+00 : f32
    %13 = vector.broadcast %cst_8 : f32 to vector<16x128xf32>
    %14 = arith.cmpf oge, %12, %13 : vector<16x128xf32>
    %cst_9 = arith.constant 1.000000e+00 : f32
    %cst_10 = arith.constant -1.000000e+00 : f32
    %15 = vector.broadcast %cst_9 : f32 to vector<16x128xf32>
    %16 = vector.broadcast %cst_10 : f32 to vector<16x128xf32>
    %17 = arith.select %14, %15, %16 : vector<16x128xi1>, vector<16x128xf32>
    %18 = math.absf %12 : vector<16x128xf32>
    %cst_11 = arith.constant 0.327591091 : f32
    %19 = vector.broadcast %cst_11 : f32 to vector<16x128xf32>
    %20 = arith.mulf %19, %18 : vector<16x128xf32>
    %cst_12 = arith.constant 1.000000e+00 : f32
    %21 = vector.broadcast %cst_12 : f32 to vector<16x128xf32>
    %22 = arith.addf %21, %20 : vector<16x128xf32>
    %23 = tpu.reciprocal %22 {approx = true} : vector<16x128xf32> -> vector<16x128xf32>
    %cst_13 = arith.constant 1.06140542 : f32
    %24 = vector.broadcast %cst_13 : f32 to vector<16x128xf32>
    %25 = arith.mulf %23, %24 : vector<16x128xf32>
    %cst_14 = arith.constant -1.45315206 : f32
    %26 = vector.broadcast %cst_14 : f32 to vector<16x128xf32>
    %27 = arith.addf %26, %25 : vector<16x128xf32>
    %28 = arith.mulf %23, %27 : vector<16x128xf32>
    %cst_15 = arith.constant 1.42141378 : f32
    %29 = vector.broadcast %cst_15 : f32 to vector<16x128xf32>
    %30 = arith.addf %29, %28 : vector<16x128xf32>
    %31 = arith.mulf %23, %30 : vector<16x128xf32>
    %cst_16 = arith.constant -0.284496725 : f32
    %32 = vector.broadcast %cst_16 : f32 to vector<16x128xf32>
    %33 = arith.addf %32, %31 : vector<16x128xf32>
    %34 = arith.mulf %23, %33 : vector<16x128xf32>
    %cst_17 = arith.constant 0.254829586 : f32
    %35 = vector.broadcast %cst_17 : f32 to vector<16x128xf32>
    %36 = arith.addf %35, %34 : vector<16x128xf32>
    %37 = arith.mulf %23, %36 : vector<16x128xf32>
    %cst_18 = arith.constant 0.000000e+00 : f32
    %38 = vector.broadcast %cst_18 : f32 to vector<16x128xf32>
    %39 = arith.subf %38, %18 : vector<16x128xf32>
    %40 = arith.mulf %39, %18 : vector<16x128xf32>
    %41 = math.exp %40 : vector<16x128xf32>
    %42 = arith.mulf %37, %41 : vector<16x128xf32>
    %cst_19 = arith.constant 1.000000e+00 : f32
    %43 = vector.broadcast %cst_19 : f32 to vector<16x128xf32>
    %44 = arith.subf %43, %42 : vector<16x128xf32>
    %45 = arith.mulf %17, %44 : vector<16x128xf32>
    %cst_20 = arith.constant 1.000000e+00 : f32
    %46 = vector.broadcast %cst_20 : f32 to vector<16x128xf32>
    %47 = arith.addf %46, %45 : vector<16x128xf32>
    %48 = arith.mulf %10, %47 : vector<16x128xf32>
    %c0_21 = arith.constant 0 : index
    %c0_22 = arith.constant 0 : index
    %49 = vector.load %arg8[%c0_21, %c0_22] : memref<16x128xf32, #tpu.memory_space<vmem>>, vector<16x128xf32>
    %50 = arith.truncf %48 : vector<16x128xf32> to vector<16x128xbf16>
    %c0_23 = arith.constant 0 : index
    %c0_24 = arith.constant 0 : index
    %51 = vector.load %arg5[%c0_23, %c0_24] : memref<128x128xbf16, #tpu.memory_space<vmem>>, vector<128x128xbf16>
    %cst_25 = arith.constant dense<0.000000e+00> : vector<16x128xf32>
    %52 = tpu.matmul %50, %51, %cst_25 {dimension_numbers = #tpu.dot_dimension_numbers<[1], [0], [0], [1], [0, 0, 1, 1], [], []>} : vector<16x128xbf16>, vector<128x128xbf16>, vector<16x128xf32> -> vector<16x128xf32>
    %53 = arith.addf %49, %52 : vector<16x128xf32>
    %c0_26 = arith.constant 0 : index
    %c0_27 = arith.constant 0 : index
    %54 = vector.load %arg8[%c0_26, %c0_27] : memref<16x128xf32, #tpu.memory_space<vmem>>, vector<16x128xf32>
    tpu.vector_store %arg8[%c0_26, %c0_27], %53 {strides = array<i32>} : memref<16x128xf32, #tpu.memory_space<vmem>>, vector<16x128xf32>,
    %c0_i32_28 = arith.constant 0 : i32
    %55 = arith.cmpi eq, %arg1, %c0_i32_28 : i32
    %56 = arith.extui %55 : i1 to i32
    %c0_i32_29 = arith.constant 0 : i32
    %57 = arith.cmpi ne, %56, %c0_i32_29 : i32
    scf.if %57 {
      %c0_30 = arith.constant 0 : index
      %c0_31 = arith.constant 0 : index
      %58 = vector.load %arg8[%c0_30, %c0_31] : memref<16x128xf32, #tpu.memory_space<vmem>>, vector<16x128xf32>
      %c0_32 = arith.constant 0 : index
      %c0_33 = arith.constant 0 : index
      %59 = vector.load %arg6[%c0_32, %c0_33] : memref<1x128xf32, #tpu.memory_space<vmem>>, vector<1x128xf32>
      %60 = vector.broadcast %59 : vector<1x128xf32> to vector<16x128xf32>
      %61 = arith.addf %58, %60 : vector<16x128xf32>
      %c0_34 = arith.constant 0 : index
      %c0_35 = arith.constant 0 : index
      %62 = vector.load %arg7[%c0_34, %c0_35] : memref<16x128xf32, #tpu.memory_space<vmem>>, vector<16x128xf32>
      tpu.vector_store %arg7[%c0_34, %c0_35], %61 {strides = array<i32>} : memref<16x128xf32, #tpu.memory_space<vmem>>, vector<16x128xf32>,
    } else {
    }
    return
  }
  func.func @transform_0(%arg0: i32, %arg1: i32) -> (i32, i32) {
    %c0_i32 = arith.constant 0 : i32
    %c0_i32_0 = arith.constant 0 : i32
    return %arg0, %c0_i32 : i32, i32
  }
  func.func @transform_1(%arg0: i32, %arg1: i32) -> (i32, i32) {
    %c0_i32 = arith.constant 0 : i32
    %c0_i32_0 = arith.constant 0 : i32
    return %c0_i32, %arg1 : i32, i32
  }
  func.func @transform_2(%arg0: i32, %arg1: i32) -> (i32, i32) {
    %c0_i32 = arith.constant 0 : i32
    %c0_i32_0 = arith.constant 0 : i32
    return %c0_i32, %arg1 : i32, i32
  }
  func.func @transform_3(%arg0: i32, %arg1: i32) -> (i32, i32) {
    %c0_i32 = arith.constant 0 : i32
    %c0_i32_0 = arith.constant 0 : i32
    return %arg1, %c0_i32 : i32, i32
  }
  func.func @transform_4(%arg0: i32, %arg1: i32) -> (i32, i32) {
    %c0_i32 = arith.constant 0 : i32
    %c0_i32_0 = arith.constant 0 : i32
    %c0_i32_1 = arith.constant 0 : i32
    return %c0_i32, %c0_i32_0 : i32, i32
  }
  func.func @transform_5(%arg0: i32, %arg1: i32) -> (i32, i32) {
    %c0_i32 = arith.constant 0 : i32
    %c0_i32_0 = arith.constant 0 : i32
    return %arg0, %c0_i32 : i32, i32
  }
}

</mosaic_0001>

<llo_original>
// kernel: tpu_custom_call.1
$region0: #{tpu_custom_call.1}
  #allocation0 [shape = 'u32[]', space=smem, size = 0x4, offset = 0x4, fixed_abs, tag = 'smem constant byte address 0x4 - core index']
  #allocation1 [shape = 'u32[72,128]{1,0:T(1,128)}', space=vmem, size = 0x9000, scoped, tag = 'internal scratch']
  #allocation2 [shape = 'f32[16,128]{1,0:T(8,128)}', space=vmem, size = 0x2000, scoped, tag = 'scratch operand']
  %s0 = inlined_call_operand.hbm [shape: bf16[32,32], index: 0, kind: input, shape index: {}]
  %s1 = inlined_call_operand.hbm [shape: bf16[32,128], index: 1, kind: input, shape index: {}]
  %s2 = inlined_call_operand.vmem [shape: f32[1,128], index: 2, kind: input, shape index: {}]
  %s3 = inlined_call_operand.hbm [shape: bf16[128,128], index: 3, kind: input, shape index: {}]
  %s4 = inlined_call_operand.vmem [shape: f32[1,128], index: 4, kind: input, shape index: {}]
  %s5 = inlined_call_operand.hbm [shape: f32[32,128], index: 5, kind: output, shape index: {}]
  %s6 = sld [smem:[#allocation0]]
  $region73: #{tpu_custom_call.1} parent=0
    _
  %s8 = ssub.s32 1, %s6
  %s9 = scalar_select 0, %s8, %s6
  $region1: #{tpu_custom_call.1} parent=0
    #allocation3 [shape = 'u8[8192]{0}', space=vmem, size = 0x2000, scoped, tag = 'input window, operand 0']
    #allocation4 [shape = 's32[2]{0}', space=sflag, size = 0x8, scoped, tag = 'scoped memory for tpu_custom_call.1']
    #allocation5 [shape = 's32[2]{0}', space=sflag, size = 0x8, scoped, tag = 'scoped memory for tpu_custom_call.1']
    #allocation6 [shape = 'u8[8192]{0}', space=vmem, size = 0x2000, scoped, tag = 'input window, operand 1, single buffered']
    #allocation7 [shape = 's32[1]{0}', space=sflag, size = 0x4, scoped, tag = 'scoped memory for tpu_custom_call.1']
    #allocation8 [shape = 'u8[32768]{0}', space=vmem, size = 0x8000, scoped, tag = 'input window, operand 3, single buffered']
    #allocation9 [shape = 'u8[16384]{0}', space=vmem, size = 0x4000, scoped, tag = 'output window, operand 0']
    %10 = vsyncpa [#allocation4], 0
    %s11 = scalar_lea.sflag [#allocation4], 1
    %12 = vsyncpa %s11, 0
    %13 = vsyncpa [#allocation7], 0
    %14 = vsyncpa [#allocation5], 0
    %s15 = scalar_lea.sflag [#allocation5], 1
    %16 = vsyncpa %s15, 0
    loop: start=0, step=1, limit=4
    $region2: #{tpu_custom_call.1} parent=1 // loop_pre_header
      _
    $region3: #{tpu_custom_call.1} parent=1 // loop_header
      %s18 = sphi 0, %s22
      %p19 = scmp.ge.s32.totalorder %s18, 4
      %s25 = sphi 0, %s37
      %s26 = sphi 0, %s33
      %s27 = sphi 0, %s25
      %s28 = sphi 0, %s26
      %s29 = sphi 0, %s27
      %s30 = sphi 0, %s28
      %s40 = sphi 0, %s42
      %s43 = sphi 0, %s40
      %s44 = sphi 0, %s43
      %s60 = sphi 0, %s44
      %s66 = sphi 0, %s68
      %s69 = sphi 0, %s66
      %s70 = sphi 0, %s69
      %s86 = sphi 0, %s70
      %s92 = sphi 0, %s94
      %s95 = sphi 0, %s92
      %s96 = sphi 0, %s95
      %s112 = sphi 0, %s96
      %s118 = sphi 0, %s120
      %s121 = sphi 0, %s118
      %s122 = sphi 0, %s121
      %s138 = sphi 0, %s122
      %s142 = sphi 0, %s142
      %s144 = sphi 0, %s142
      %s145 = sphi 0, %s144
      %s159 = sphi 0, %s145
      %s165 = sphi 0, %s167
      %s168 = sphi 0, %s165
      %s169 = sphi 0, %s168
      %s185 = sphi 0, %s169
    $region4: #{tpu_custom_call.1} parent=1 // loop_header_branch
      %21 = sbr.rel (%p19) target = $region8
    $region5: #{tpu_custom_call.1} parent=1 // loop_body
      %s23 = ssub.s32 %s18, 1
      %s24 = ssub.s32 %s18, 2
      %s31 = sadd.s32 1, %s26
      %p32 = scmp.ge.s32.totalorder %s31, 1
      %s33 = scalar_select %p32, 0, %s31
      %s34 = sadd.s32 1, %s25
      %s35 = scalar_select %p32, %s34, %s25
      %p36 = scmp.ge.s32.totalorder %s35, 2
      %s37 = scalar_select %p36, 0, %s35
      %s38 = ssub.s32 %s25, %s37
      %p39 = scmp.eq.s32.totalorder %s38, 0
      %s41 = sadd.s32 %s40, 1
      %s42 = scalar_select %p39, %s40, %s41
      %p45 = pneg %p39
      %p46 = scmp.eq.s32.totalorder %s18, 1
      %p47 = por %p45, %p46
      %p48 = scmp.ne.s32.totalorder %s40, %s43
      %p49 = scmp.eq.s32.totalorder %s18, 0
      %p50 = por %p48, %p49
      %p51 = scmp.ne.s32.totalorder %s40, %s43
      %p52 = scmp.eq.s32.totalorder %s23, 1
      %p53 = por %p51, %p52
      %p54 = scmp.ne.s32.totalorder %s43, %s44
      %p55 = scmp.eq.s32.totalorder %s23, 0
      %p56 = por %p54, %p55
      %p57 = scmp.ne.s32.totalorder %s43, %s44
      %p58 = scmp.eq.s32.totalorder %s24, 1
      %p59 = por %p57, %p58
      %p61 = scmp.ne.s32.totalorder %s44, %s60
      %p62 = scmp.eq.s32.totalorder %s24, 0
      %p63 = por %p61, %p62
      %s64 = ssub.s32 %s26, %s33
      %p65 = scmp.eq.s32.totalorder %s64, 0
      %s67 = sadd.s32 %s66, 1
      %s68 = scalar_select %p65, %s66, %s67
      %p71 = pneg %p65
      %p72 = scmp.eq.s32.totalorder %s18, 1
      %p73 = por %p71, %p72
      %p74 = scmp.ne.s32.totalorder %s66, %s69
      %p75 = scmp.eq.s32.totalorder %s18, 0
      %p76 = por %p74, %p75
      %p77 = scmp.ne.s32.totalorder %s66, %s69
      %p78 = scmp.eq.s32.totalorder %s23, 1
      %p79 = por %p77, %p78
      %p80 = scmp.ne.s32.totalorder %s69, %s70
      %p81 = scmp.eq.s32.totalorder %s23, 0
      %p82 = por %p80, %p81
      %p83 = scmp.ne.s32.totalorder %s69, %s70
      %p84 = scmp.eq.s32.totalorder %s24, 1
      %p85 = por %p83, %p84
      %p87 = scmp.ne.s32.totalorder %s70, %s86
      %p88 = scmp.eq.s32.totalorder %s24, 0
      %p89 = por %p87, %p88
      %s90 = ssub.s32 %s26, %s33
      %p91 = scmp.eq.s32.totalorder %s90, 0
      %s93 = sadd.s32 %s92, 1
      %s94 = scalar_select %p91, %s92, %s93
      %p97 = pneg %p91
      %p98 = scmp.eq.s32.totalorder %s18, 1
      %p99 = por %p97, %p98
      %p100 = scmp.ne.s32.totalorder %s92, %s95
      %p101 = scmp.eq.s32.totalorder %s18, 0
      %p102 = por %p100, %p101
      %p103 = scmp.ne.s32.totalorder %s92, %s95
      %p104 = scmp.eq.s32.totalorder %s23, 1
      %p105 = por %p103, %p104
      %p106 = scmp.ne.s32.totalorder %s95, %s96
      %p107 = scmp.eq.s32.totalorder %s23, 0
      %p108 = por %p106, %p107
      %p109 = scmp.ne.s32.totalorder %s95, %s96
      %p110 = scmp.eq.s32.totalorder %s24, 1
      %p111 = por %p109, %p110
      %p113 = scmp.ne.s32.totalorder %s96, %s112
      %p114 = scmp.eq.s32.totalorder %s24, 0
      %p115 = por %p113, %p114
      %s116 = ssub.s32 %s26, %s33
      %p117 = scmp.eq.s32.totalorder %s116, 0
      %s119 = sadd.s32 %s118, 1
      %s120 = scalar_select %p117, %s118, %s119
      %p123 = pneg %p117
      %p124 = scmp.eq.s32.totalorder %s18, 1
      %p125 = por %p123, %p124
      %p126 = scmp.ne.s32.totalorder %s118, %s121
      %p127 = scmp.eq.s32.totalorder %s18, 0
      %p128 = por %p126, %p127
      %p129 = scmp.ne.s32.totalorder %s118, %s121
      %p130 = scmp.eq.s32.totalorder %s23, 1
      %p131 = por %p129, %p130
      %p132 = scmp.ne.s32.totalorder %s121, %s122
      %p133 = scmp.eq.s32.totalorder %s23, 0
      %p134 = por %p132, %p133
      %p135 = scmp.ne.s32.totalorder %s121, %s122
      %p136 = scmp.eq.s32.totalorder %s24, 1
      %p137 = por %p135, %p136
      %p139 = scmp.ne.s32.totalorder %s122, %s138
      %p140 = scmp.eq.s32.totalorder %s24, 0
      %p141 = por %p139, %p140
      %s143 = sadd.s32 %s142, 1
      %p146 = scmp.eq.s32.totalorder %s18, 1
      %p147 = scmp.ne.s32.totalorder %s142, %s144
      %p148 = scmp.eq.s32.totalorder %s18, 0
      %p149 = por %p147, %p148
      %p150 = scmp.ne.s32.totalorder %s142, %s144
      %p151 = scmp.eq.s32.totalorder %s23, 1
      %p152 = por %p150, %p151
      %p153 = scmp.ne.s32.totalorder %s144, %s145
      %p154 = scmp.eq.s32.totalorder %s23, 0
      %p155 = por %p153, %p154
      %p156 = scmp.ne.s32.totalorder %s144, %s145
      %p157 = scmp.eq.s32.totalorder %s24, 1
      %p158 = por %p156, %p157
      %p160 = scmp.ne.s32.totalorder %s145, %s159
      %p161 = scmp.eq.s32.totalorder %s24, 0
      %p162 = por %p160, %p161
      %s163 = ssub.s32 %s25, %s37
      %p164 = scmp.eq.s32.totalorder %s163, 0
      %s166 = sadd.s32 %s165, 1
      %s167 = scalar_select %p164, %s165, %s166
      %p170 = pneg %p164
      %p171 = scmp.eq.s32.totalorder %s18, 1
      %p172 = por %p170, %p171
      %p173 = scmp.ne.s32.totalorder %s165, %s168
      %p174 = scmp.eq.s32.totalorder %s18, 0
      %p175 = por %p173, %p174
      %p176 = scmp.ne.s32.totalorder %s165, %s168
      %p177 = scmp.eq.s32.totalorder %s23, 1
      %p178 = por %p176, %p177
      %p179 = scmp.ne.s32.totalorder %s168, %s169
      %p180 = scmp.eq.s32.totalorder %s23, 0
      %p181 = por %p179, %p180
      %p182 = scmp.ne.s32.totalorder %s168, %s169
      %p183 = scmp.eq.s32.totalorder %s24, 1
      %p184 = por %p182, %p183
      %p186 = scmp.ne.s32.totalorder %s169, %s185
      %p187 = scmp.eq.s32.totalorder %s24, 0
      %p188 = por %p186, %p187
      %p189 = scmp.le.s32.totalorder 1, %s18
      %p190 = scmp.lt.s32.totalorder %s18, 3
      %p191 = pnand %p189, %p190
      %p192 = pneg %p191
      // Predicated region
      $region9: #{tpu_custom_call.1} parent=5 // pred_check
        _
      $region10: #{tpu_custom_call.1} parent=5 // pred_check_branch
        %194 = sbr.rel (%p191) target = $region12
      $region11: #{tpu_custom_call.1} parent=5 // pred_region
        %s195 = ssub.s32 %s18, 1
        // Predicated region
        $region13: #{tpu_custom_call.1} parent=11 // pred_check
          %p196 = pneg %p82
        $region14: #{tpu_custom_call.1} parent=11 // pred_check_branch
          %198 = sbr.rel (%p196) target = $region16
        $region15: #{tpu_custom_call.1} parent=11 // pred_region
          %200 = vsyncadd [#allocation7], 0
          %s201 = smul.addr %s28, 4
          %s202 = scalar_lea.hbm %s1, %s201
          %s203 = sshll.u32 %s202, 4
          %s204 = int_to_ptr.hbm [resolvable:$true] %s203
          %s205 = sshll.u32 [#allocation6], 4
          %s206 = int_to_ptr.vmem [resolvable:$true] %s205
          %211 = dma.hbm_to_vmem [thread:$0]  %s204, 256, %s206, [#allocation7], 64, 64, 4
        $region16: #{tpu_custom_call.1} parent=11 // pred_fallthru
          _
        // Predicated region
        $region17: #{tpu_custom_call.1} parent=11 // pred_check
          %p212 = pneg %p108
        $region18: #{tpu_custom_call.1} parent=11 // pred_check_branch
          %214 = sbr.rel (%p212) target = $region20
        $region19: #{tpu_custom_call.1} parent=11 // pred_region
          %p215 = scmp.lt.s32.totalorder %s28, 0
          %s216 = scalar_select %p215, %s28, 0
          %s217 = scalar_lea.vmem %s2, %s216
        $region20: #{tpu_custom_call.1} parent=11 // pred_fallthru
          _
        // Predicated region
        $region21: #{tpu_custom_call.1} parent=11 // pred_check
          %p218 = pneg %p134
        $region22: #{tpu_custom_call.1} parent=11 // pred_check_branch
          %220 = sbr.rel (%p218) target = $region24
        $region23: #{tpu_custom_call.1} parent=11 // pred_region
          %s221 = smul.u32 16, %s28
          %223 = vsyncadd [#allocation7], 0
          %s224 = smul.addr %s221, 4
          %s225 = scalar_lea.hbm %s3, %s224
          %s226 = sshll.u32 %s225, 4
          %s227 = int_to_ptr.hbm [resolvable:$true] %s226
          %s228 = sshll.u32 [#allocation8], 4
          %s229 = int_to_ptr.vmem [resolvable:$true] %s228
          %234 = dma.hbm_to_vmem [thread:$0]  %s227, 1024, %s229, [#allocation7], 64, 64, 4
        $region24: #{tpu_custom_call.1} parent=11 // pred_fallthru
          _
        // Predicated region
        $region25: #{tpu_custom_call.1} parent=11 // pred_check
          %p235 = pneg %p155
        $region26: #{tpu_custom_call.1} parent=11 // pred_check_branch
          %237 = sbr.rel (%p235) target = $region28
        $region27: #{tpu_custom_call.1} parent=11 // pred_region
          _
        $region28: #{tpu_custom_call.1} parent=11 // pred_fallthru
          _
      $region12: #{tpu_custom_call.1} parent=5 // pred_fallthru
        _
      %p238 = scmp.lt.s32.totalorder %s18, 2
      // Predicated region
      $region29: #{tpu_custom_call.1} parent=5 // pred_check
        %p239 = pneg %p238
      $region30: #{tpu_custom_call.1} parent=5 // pred_check_branch
        %241 = sbr.rel (%p239) target = $region32
      $region31: #{tpu_custom_call.1} parent=5 // pred_region
        // Predicated region
        $region33: #{tpu_custom_call.1} parent=31 // pred_check
          %p242 = pneg %p50
        $region34: #{tpu_custom_call.1} parent=31 // pred_check_branch
          %244 = sbr.rel (%p242) target = $region36
        $region35: #{tpu_custom_call.1} parent=31 // pred_region
          %s245 = sand.u32 %s40, 1
          %s246 = scalar_lea.sflag [#allocation4], %s245
          %s247 = sand.u32 %s40, 1
          %s248 = smul.addr %s247, 8
          %s249 = scalar_lea.vmem [#allocation3], %s248
          %s250 = smul.u32 2, %s25
          %252 = vsyncadd %s246, 0
          %s253 = smul.addr %s250, 4
          %s254 = scalar_lea.hbm %s0, %s253
          %s255 = sshll.u32 %s254, 4
          %s256 = int_to_ptr.hbm [resolvable:$true] %s255
          %s257 = sshll.u32 %s249, 4
          %s258 = int_to_ptr.vmem [resolvable:$true] %s257
          %263 = dma.hbm_to_vmem [thread:$0]  %s256, 128, %s258, %s246, 64, 64, 4
        $region36: #{tpu_custom_call.1} parent=31 // pred_fallthru
          _
      $region32: #{tpu_custom_call.1} parent=5 // pred_fallthru
        _
      %p264 = scmp.le.s32.totalorder 1, %s18
      %p265 = scmp.lt.s32.totalorder %s18, 3
      %p266 = pnand %p264, %p265
      %p267 = pneg %p266
      // Predicated region
      $region37: #{tpu_custom_call.1} parent=5 // pred_check
        _
      $region38: #{tpu_custom_call.1} parent=5 // pred_check_branch
        %269 = sbr.rel (%p266) target = $region40
      $region39: #{tpu_custom_call.1} parent=5 // pred_region
        %s270 = ssub.s32 %s18, 1
        %s271 = sand.u32 %s43, 1
        %s272 = scalar_lea.sflag [#allocation4], %s271
        %s273 = sand.u32 %s43, 1
        %s274 = smul.addr %s273, 8
        %s275 = scalar_lea.vmem [#allocation3], %s274
        // Predicated region
        $region41: #{tpu_custom_call.1} parent=39 // pred_check
          %p276 = pneg %p56
        $region42: #{tpu_custom_call.1} parent=39 // pred_check_branch
          %278 = sbr.rel (%p276) target = $region44
        $region43: #{tpu_custom_call.1} parent=39 // pred_region
          %280 = dma.done %s272, 128
        $region44: #{tpu_custom_call.1} parent=39 // pred_fallthru
          _
        // Predicated region
        $region45: #{tpu_custom_call.1} parent=39 // pred_check
          %p281 = pneg %p82
        $region46: #{tpu_custom_call.1} parent=39 // pred_check_branch
          %283 = sbr.rel (%p281) target = $region48
        $region47: #{tpu_custom_call.1} parent=39 // pred_region
          %285 = dma.done [#allocation7], 256
        $region48: #{tpu_custom_call.1} parent=39 // pred_fallthru
          _
        // Predicated region
        $region49: #{tpu_custom_call.1} parent=39 // pred_check
          %p286 = pneg %p134
        $region50: #{tpu_custom_call.1} parent=39 // pred_check_branch
          %288 = sbr.rel (%p286) target = $region52
        $region51: #{tpu_custom_call.1} parent=39 // pred_region
          %290 = dma.done [#allocation7], 1024
        $region52: #{tpu_custom_call.1} parent=39 // pred_fallthru
          _
        %s291 = sand.u32 %s43, 1
        %s292 = scalar_lea.sflag [#allocation4], %s291
        %s293 = sand.u32 %s43, 1
        %s294 = smul.addr %s293, 8
        %s295 = scalar_lea.vmem [#allocation3], %s294
        %p296 = pneg %p56
        %p297 = pneg %p53
        %p298 = pneg %p82
        %p299 = pneg %p79
        %p300 = scmp.lt.s32.totalorder %s28, 0
        %s301 = scalar_select %p300, %s28, 0
        %s302 = scalar_lea.vmem %s2, %s301
        %p303 = pneg %p108
        %p304 = pneg %p105
        %p305 = pneg %p134
        %p306 = pneg %p131
        %p307 = pneg %p155
        %p308 = pneg %p152
        %p309 = pneg %p181
        %p310 = pneg %p178
        %s311 = sand.u32 %s168, 1
        %s312 = scalar_lea.sflag [#allocation5], %s311
        %s313 = sand.u32 %s168, 1
        %s314 = smul.addr %s313, 16
        %s315 = scalar_lea.vmem [#allocation9], %s314
        %s316 = smul.u32 2, %s27
        %p317 = scmp.lt.s32.totalorder %s28, 0
        %s318 = scalar_select %p317, %s28, 0
        %s319 = scalar_lea.vmem %s2, %s318
        %s320 = smul.u32 16, %s28
        %s321 = smul.u32 2, %s27
        %p323 = scmp.eq.s32.totalorder %s28, 0
        // Predicated region
        $region53: #{tpu_custom_call.1} parent=39 // pred_check
          %p324 = pneg %p323
        $region54: #{tpu_custom_call.1} parent=39 // pred_check_branch
          %326 = sbr.rel (%p324) target = $region56
        $region55: #{tpu_custom_call.1} parent=39 // pred_region
          %327 = vst [vmem:[#allocation2] sm:$0xff] 0.0
          %328 = vst [vmem:[#allocation2 + $0x8] sm:$0xff] 0.0
        $region56: #{tpu_custom_call.1} parent=39 // pred_fallthru
          _
        %v329 = vld [vmem:[%s275] sm:$0xf]
        %v330 = vld [vmem:[%s275 + $0x4] sm:$0xf]
        %v331 = vld [vmem:[#allocation6] sm:$0xf]
        %v332 = vld [vmem:[#allocation6 + $0x4] sm:$0xf]
        %v333 = vld [vmem:[#allocation6 + $0x8] sm:$0xf]
        %v334 = vld [vmem:[#allocation6 + $0xc] sm:$0xf]
        %v335 = vld [vmem:[%s319] sm:$0x1]
        %v337 = vperm.slane %v335, 0
        %v341 = vunpack.c.l.b16 %v329
        %v342 = vunpack.c.l.b16 %v330
        %v343 = vpack.c.b16 %v342, %v341
        %v348 = vunpack.c.l.b16 %v331
        %v349 = vunpack.c.l.b16 %v332
        %v350 = vunpack.c.l.b16 %v333
        %v351 = vunpack.c.l.b16 %v334
        %v352 = vpack.c.b16 %v349, %v348
        %v353 = vpack.c.b16 %v351, %v350
        %vm356 = vcmask 261120
        %v358 = vsel %vm356, %v343, 0
        %360 = vmatpush.bf16.msra.mxu0 0
        %361 = vmatpush.bf16.msra.mxu0 0
        %362 = vmatpush.bf16.msra.mxu0 0
        %363 = vmatpush.bf16.msra.mxu0 0
        %364 = vmatpush.bf16.msra.mxu0 0
        %365 = vmatpush.bf16.msra.mxu0 0
        %366 = vmatpush.bf16.msra.mxu0 %v353
        %367 = vmatpush.bf16.msra.mxu0 %v352
        %368 = vmatmul.bf16.gmra.mxu0 %v358
        %v369 = vpop.f32.mrf.mxu0
        %v370 = vadd.f32 %v337, %v369
        %v371 = vpop.f32.mrf.mxu0
        %v372 = vadd.f32 %v337, %v371
        %373 = vdwg.mxu0
        %v374 = vmul.f32 %v370, 0.5
        %v375 = vmul.f32 %v372, 0.5
        %v376 = vmul.f32 %v370, 0.70710677
        %v377 = vmul.f32 %v372, 0.70710677
        %vm378 = vcmp.ge.f32.partialorder %v376, 0.0
        %vm379 = vcmp.ge.f32.partialorder %v377, 0.0
        %v380 = vsel %vm378, 1.0, -1.0
        %v381 = vsel %vm379, 1.0, -1.0
        %v382 = vand.u32 2147483647, %v376
        %v383 = vand.u32 2147483647, %v377
        %v384 = vmul.f32 %v382, 0.3275911
        %v385 = vmul.f32 %v383, 0.3275911
        %v386 = vadd.f32 %v384, 1.0
        %v387 = vadd.f32 %v385, 1.0
        %v388 = vrcp.pop %v386
        %v389 = vrcp.pop %v387
        %v390 = vmul.f32 %v388, 1.0614054
        %v391 = vmul.f32 %v389, 1.0614054
        %v392 = vadd.f32 %v390, -1.4531521
        %v393 = vadd.f32 %v391, -1.4531521
        %v394 = vmul.f32 %v388, %v392
        %v395 = vmul.f32 %v389, %v393
        %v396 = vadd.f32 %v394, 1.4214138
        %v397 = vadd.f32 %v395, 1.4214138
        %v398 = vmul.f32 %v388, %v396
        %v399 = vmul.f32 %v389, %v397
        %v400 = vadd.f32 %v398, -0.28449672
        %v401 = vadd.f32 %v399, -0.28449672
        %v402 = vmul.f32 %v388, %v400
        %v403 = vmul.f32 %v389, %v401
        %v404 = vadd.f32 %v402, 0.2548296
        %v405 = vadd.f32 %v403, 0.2548296
        %v406 = vmul.f32 %v388, %v404
        %v407 = vmul.f32 %v389, %v405
        %v408 = vsub.f32 0.0, %v382
        %v409 = vsub.f32 0.0, %v383
        %v410 = vmul.f32 %v408, %v382
        %v411 = vmul.f32 %v409, %v383
        %v412 = vmul.f32 %v410, 1.442695
        %v413 = vpow.pop %v412
        %v414 = vmul.f32 %v411, 1.442695
        %v415 = vpow.pop %v414
        %v416 = vmul.f32 %v406, %v413
        %v417 = vmul.f32 %v407, %v415
        %v418 = vsub.f32 1.0, %v416
        %v419 = vsub.f32 1.0, %v417
        %v420 = vmul.f32 %v380, %v418
        %v421 = vmul.f32 %v381, %v419
        %v422 = vadd.f32 %v420, 1.0
        %v423 = vadd.f32 %v421, 1.0
        %v424 = vmul.f32 %v374, %v422
        %v425 = vmul.f32 %v375, %v423
        %v426 = vld [vmem:[#allocation2] sm:$0xff]
        %v427 = vld [vmem:[#allocation2 + $0x8] sm:$0xff]
        %v428 = vpack.c.bf16 %v425, %v424
        %v429 = vld [vmem:[#allocation8] sm:$0xf]
        %v430 = vld [vmem:[#allocation8 + $0x4] sm:$0xf]
        %v431 = vld [vmem:[#allocation8 + $0x8] sm:$0xf]
        %v432 = vld [vmem:[#allocation8 + $0xc] sm:$0xf]
        %v433 = vld [vmem:[#allocation8 + $0x10] sm:$0xf]
        %v434 = vld [vmem:[#allocation8 + $0x14] sm:$0xf]
        %v435 = vld [vmem:[#allocation8 + $0x18] sm:$0xf]
        %v436 = vld [vmem:[#allocation8 + $0x1c] sm:$0xf]
        %v437 = vld [vmem:[#allocation8 + $0x20] sm:$0xf]
        %v438 = vld [vmem:[#allocation8 + $0x24] sm:$0xf]
        %v439 = vld [vmem:[#allocation8 + $0x28] sm:$0xf]
        %v440 = vld [vmem:[#allocation8 + $0x2c] sm:$0xf]
        %v441 = vld [vmem:[#allocation8 + $0x30] sm:$0xf]
        %v442 = vld [vmem:[#allocation8 + $0x34] sm:$0xf]
        %v443 = vld [vmem:[#allocation8 + $0x38] sm:$0xf]
        %v444 = vld [vmem:[#allocation8 + $0x3c] sm:$0xf]
        %v461 = vunpack.c.l.b16 %v429
        %v462 = vunpack.c.l.b16 %v430
        %v463 = vunpack.c.l.b16 %v431
        %v464 = vunpack.c.l.b16 %v432
        %v465 = vunpack.c.l.b16 %v433
        %v466 = vunpack.c.l.b16 %v434
        %v467 = vunpack.c.l.b16 %v435
        %v468 = vunpack.c.l.b16 %v436
        %v469 = vunpack.c.l.b16 %v437
        %v470 = vunpack.c.l.b16 %v438
        %v471 = vunpack.c.l.b16 %v439
        %v472 = vunpack.c.l.b16 %v440
        %v473 = vunpack.c.l.b16 %v441
        %v474 = vunpack.c.l.b16 %v442
        %v475 = vunpack.c.l.b16 %v443
        %v476 = vunpack.c.l.b16 %v444
        %v477 = vpack.c.b16 %v462, %v461
        %v478 = vpack.c.b16 %v464, %v463
        %v479 = vpack.c.b16 %v466, %v465
        %v480 = vpack.c.b16 %v468, %v467
        %v481 = vpack.c.b16 %v470, %v469
        %v482 = vpack.c.b16 %v472, %v471
        %v483 = vpack.c.b16 %v474, %v473
        %v484 = vpack.c.b16 %v476, %v475
        %493 = vmatpush.bf16.msra.mxu0 %v484
        %494 = vmatpush.bf16.msra.mxu0 %v483
        %495 = vmatpush.bf16.msra.mxu0 %v482
        %496 = vmatpush.bf16.msra.mxu0 %v481
        %497 = vmatpush.bf16.msra.mxu0 %v480
        %498 = vmatpush.bf16.msra.mxu0 %v479
        %499 = vmatpush.bf16.msra.mxu0 %v478
        %500 = vmatpush.bf16.msra.mxu0 %v477
        %501 = vmatmul.bf16.gmra.mxu0 %v428
        %v502 = vpop.f32.mrf.mxu0
        %v503 = vadd.f32 0.0, %v502
        %v504 = vpop.f32.mrf.mxu0
        %v505 = vadd.f32 0.0, %v504
        %506 = vdwg.mxu0
        %v507 = vadd.f32 %v426, %v503
        %v508 = vadd.f32 %v427, %v505
        %509 = vst [vmem:[#allocation2] sm:$0xff] %v507
        %510 = vst [vmem:[#allocation2 + $0x8] sm:$0xff] %v508
        // Predicated region
        $region57: #{tpu_custom_call.1} parent=39 // pred_check
          %p511 = pneg %p323
        $region58: #{tpu_custom_call.1} parent=39 // pred_check_branch
          %513 = sbr.rel (%p511) target = $region60
        $region59: #{tpu_custom_call.1} parent=39 // pred_region
          %v514 = vld [vmem:[#allocation2] sm:$0xff]
          %v515 = vld [vmem:[#allocation2 + $0x8] sm:$0xff]
          %v516 = vld [vmem:[%s4] sm:$0x1]
          %v518 = vperm.slane %v516, 0
          %v520 = vadd.f32 %v514, %v518
          %v521 = vadd.f32 %v515, %v518
          %522 = vst [vmem:[%s315] sm:$0xff] %v520
          %523 = vst [vmem:[%s315 + $0x8] sm:$0xff] %v521
        $region60: #{tpu_custom_call.1} parent=39 // pred_fallthru
          _
        %s524 = sand.u32 %s168, 1
        %s525 = scalar_lea.sflag [#allocation5], %s524
        %s526 = sand.u32 %s168, 1
        %s527 = smul.addr %s526, 16
        %s528 = scalar_lea.vmem [#allocation9], %s527
        // Predicated region
        $region61: #{tpu_custom_call.1} parent=39 // pred_check
          %p529 = pneg %p178
        $region62: #{tpu_custom_call.1} parent=39 // pred_check_branch
          %531 = sbr.rel (%p529) target = $region64
        $region63: #{tpu_custom_call.1} parent=39 // pred_region
          %s532 = smul.u32 2, %s27
          %534 = vsyncadd %s525, 0
          %s535 = smul.addr %s532, 8
          %s536 = scalar_lea.hbm %s5, %s535
          %s537 = sshll.u32 %s528, 4
          %s538 = int_to_ptr.vmem [resolvable:$true] %s537
          %s539 = sshll.u32 %s536, 4
          %s540 = int_to_ptr.hbm [resolvable:$true] %s539
          %545 = dma.vmem_to_hbm [thread:$0]  %s538, 256, %s540, %s525, 128, 128, 8
        $region64: #{tpu_custom_call.1} parent=39 // pred_fallthru
          _
      $region40: #{tpu_custom_call.1} parent=5 // pred_fallthru
        _
      %p546 = scmp.le.s32.totalorder 2, %s18
      // Predicated region
      $region65: #{tpu_custom_call.1} parent=5 // pred_check
        %p547 = pneg %p546
      $region66: #{tpu_custom_call.1} parent=5 // pred_check_branch
        %549 = sbr.rel (%p547) target = $region68
      $region67: #{tpu_custom_call.1} parent=5 // pred_region
        %s550 = ssub.s32 %s18, 2
        // Predicated region
        $region69: #{tpu_custom_call.1} parent=67 // pred_check
          %p551 = pneg %p184
        $region70: #{tpu_custom_call.1} parent=67 // pred_check_branch
          %553 = sbr.rel (%p551) target = $region72
        $region71: #{tpu_custom_call.1} parent=67 // pred_region
          %s554 = sand.u32 %s169, 1
          %s555 = scalar_lea.sflag [#allocation5], %s554
          %s556 = sand.u32 %s169, 1
          %s557 = smul.addr %s556, 16
          %s558 = scalar_lea.vmem [#allocation9], %s557
          %560 = dma.done %s555, 256
        $region72: #{tpu_custom_call.1} parent=67 // pred_fallthru
          _
      $region68: #{tpu_custom_call.1} parent=5 // pred_fallthru
        _
    $region6: #{tpu_custom_call.1} parent=1 // loop_footer
      %s22 = sadd.s32 1, %s18
    $region7: #{tpu_custom_call.1} parent=1 // loop_footer_branch
      %17 = sbr.rel target = $region3
    $region8: #{tpu_custom_call.1} parent=1 // loop_exit
      _
    %561 = vsyncpa [#allocation4], 1
    %s562 = scalar_lea.sflag [#allocation4], 1
    %563 = vsyncpa %s562, 1
    %564 = vsyncpa [#allocation7], 1
    %565 = vsyncpa [#allocation5], 1
    %s566 = scalar_lea.sflag [#allocation5], 1
    %567 = vsyncpa %s566, 1

</llo_original>
